<compile_context>
chip_gen: v5e
topology: v5e:2x2
jax: 0.10.0
libtpu: 0.0.40
codegen_flags: <defaults>
</compile_context>

<pallas_src>
import math
import functools

import jax
import jax.numpy as jnp
from jax.experimental import pallas as pl
from jax.experimental.pallas import tpu as pltpu


def _round_up(v, m):
    return ((v + m - 1) // m) * m


def _halo_index_map(tile_blocks, max_block_idx):
    def idx(n, t):
        # Clamp so the halo fetch never starts past the array end.  Whenever the
        # clamp actually changes the index, the halo data is only used for
        # output columns that are dropped (beyond L_out), so correctness holds.
        return (n, 0, jnp.minimum((t + 1) * tile_blocks, max_block_idx))
    return idx


def _residual_block_kernel(*refs, K, dilation, off_res, off_c, C_d, C_res,
                           fuse_fg, fuse_rs, has_cond, compute_dtype):
    if has_cond:
        (x_ref, xh_ref, c_ref, ch_ref, wfg_ref, bfg_ref, wc_ref,
         wrs_ref, brs_ref, res_ref, skip_ref) = refs
    else:
        (x_ref, xh_ref, wfg_ref, bfg_ref,
         wrs_ref, brs_ref, res_ref, skip_ref) = refs

    l_tile = res_ref.shape[2]

    def window_cols(main, halo, start):
        # Columns [start, start + l_tile) of the logical window [main | halo].
        mw = main.shape[1]
        if start == 0:
            return main
        if start >= mw:                      # only possible when l_tile == halo_block
            return halo[:, start - mw:start - mw + l_tile]
        return jnp.concatenate([main[:, start:], halo[:, :start + l_tile - mw]],
                               axis=1)

    x_main = x_ref[0]            # (C_in, l_tile)
    x_halo = xh_ref[0]           # (C_in, halo_block)

    # ---- dilated conv as one im2col matmul (K taps stacked on sublanes) -------
    taps = [window_cols(x_main, x_halo, k * dilation) for k in range(K)]
    x_col = (taps[0] if K == 1 else jnp.concatenate(taps, axis=0))
    x_col = x_col.astype(compute_dtype)                     # (K*C_in, l_tile)

    if has_cond:
        c_cols = window_cols(c_ref[0], ch_ref[0], off_c).astype(compute_dtype)

    if fuse_fg:
        fg = jnp.dot(wfg_ref[...], x_col, preferred_element_type=jnp.float32)
        if has_cond:
            fg = fg + jnp.dot(wc_ref[...], c_cols, preferred_element_type=jnp.float32)
        fg = fg + bfg_ref[...]                               # (2*Cd, 1) broadcast
        f, g = fg[:C_d], fg[C_d:]                            # sublane-aligned split
    else:
        # Cd not a multiple of 8: keep separate dots so no misaligned split.
        f = jnp.dot(wfg_ref[:C_d], x_col, preferred_element_type=jnp.float32)
        g = jnp.dot(wfg_ref[C_d:], x_col, preferred_element_type=jnp.float32)
        if has_cond:
            f = f + jnp.dot(wc_ref[:C_d], c_cols, preferred_element_type=jnp.float32)
            g = g + jnp.dot(wc_ref[C_d:], c_cols, preferred_element_type=jnp.float32)
        f = f + bfg_ref[:C_d]
        g = g + bfg_ref[C_d:]

    # Gated activation; sigmoid via tanh keeps it at 2 EUP ops / element (f32
    # elementwise math: v5e has no bf16 VPU/EUP path).
    h = jnp.tanh(f) * (0.5 * jnp.tanh(0.5 * g) + 0.5)        # (Cd, l_tile) f32
    hc = h.astype(compute_dtype)

    # ---- fused 1x1 residual / skip convs ---------------------------------------
    if fuse_rs:
        rs = jnp.dot(wrs_ref[...], hc, preferred_element_type=jnp.float32) + brs_ref[...]
        res, skp = rs[:C_res], rs[C_res:]
    else:
        res = jnp.dot(wrs_ref[:C_res], hc, preferred_element_type=jnp.float32) + brs_ref[:C_res]
        skp = jnp.dot(wrs_ref[C_res:], hc, preferred_element_type=jnp.float32) + brs_ref[C_res:]

    # ---- residual add with x[..., -L_out:] -------------------------------------
    # With padding == 0 this is exactly conv tap K-1, so reuse it for free.
    if off_res % dilation == 0 and off_res // dilation < K:
        x_res = taps[off_res // dilation]
    else:
        x_res = window_cols(x_main, x_halo, off_res)
    res_ref[0] = (x_res.astype(jnp.float32) + res).astype(res_ref.dtype)
    skip_ref[0] = skp.astype(skip_ref.dtype)


def residual_block_forward(x, condition,
                           conv_w, conv_b, cond_w, cond_b,
                           res_w, res_b, skip_w, skip_b, *,
                           stride=1, padding=0, dilation=1, groups=1,
                           l_tile=None, compute_dtype=jnp.float32):
    """x: (N, C_in, L); condition: (N, C_cond, L_c) or None.
    conv_w: (2*Cd, C_in, K); cond_w: (2*Cd, C_cond, 1);
    res_w: (C_res, Cd, 1); skip_w: (C_skip, Cd, 1); biases 1-D (or None).
    Returns (out (N, C_res, L_out), skip (N, C_skip, L_out)).
    compute_dtype=jnp.bfloat16 is recommended on v6e/v7x (halves activation
    HBM bytes and feeds the bf16 MXU); accumulation/elementwise stays f32."""
    N, C_in, L = x.shape
    two_cd, c_in_w, K = conv_w.shape
    C_d = two_cd // 2
    C_res, C_skip = res_w.shape[0], skip_w.shape[0]
    out_dtype = x.dtype

    assert c_in_w == C_in and two_cd == 2 * C_d
    assert res_w.shape[1] == C_d and skip_w.shape[1] == C_d
    # TODO(synk): groups > 1 (grouped conv) not implemented.
    assert groups == 1
    # TODO(synk): stride > 1 not implemented (the module's residual narrow-add
    # only makes sense with unit stride).
    assert stride == 1
    assert C_in == C_res, "residual add requires in_channels == residual_channels"

    halo = dilation * (K - 1)
    L_out = L + 2 * padding - halo
    assert L_out >= 1
    assert 2 * padding <= halo, "x.narrow(2, -L_out, L_out) requires L_out <= L"

    has_cond = condition is not None
    C_cond = condition.shape[1] if has_cond else 0
    if has_cond:
        n_c, _, L_cond = condition.shape
        assert n_c == N and L_cond >= L_out
        # cond_conv uses the same padding; padding != 0 would shape-mismatch in
        # the PyTorch module, so padding == 0 is the only valid conditioned config.
        assert padding == 0

    # ---- dtype plumbing: cast activations in the wrapper when the compute
    # dtype is narrower (halves HBM bytes streamed by the kernel). -------------
    cmp_b = jnp.dtype(compute_dtype).itemsize
    if cmp_b < jnp.dtype(x.dtype).itemsize:
        x = x.astype(compute_dtype)
        if has_cond:
            condition = condition.astype(compute_dtype)
    x_b = jnp.dtype(x.dtype).itemsize
    c_b = jnp.dtype(condition.dtype).itemsize if has_cond else 0
    o_b = jnp.dtype(out_dtype).itemsize

    # Conv padding (rare path; padding == 0 is the canonical WaveNet config and
    # takes the zero-copy path).
    # TODO(synk): fold padding > 0 into the kernel with first/last tile masking
    # to avoid this extra HBM pass over x.
    if padding > 0:
        x = jnp.pad(x, ((0, 0), (0, 0), (padding, padding)))

    # ---- L tiling --------------------------------------------------------------
    halo_block = 128 * ((max(halo, 1) + 127) // 128)     # lane-aligned halo fetch
    if l_tile is None:
        # Rough VMEM bytes per output lane (double-buffered I/O + temporaries).
        per_lane = (4 * (C_in * x_b + C_cond * c_b)
                    + 2 * (C_res + C_skip) * o_b
                    + (K * C_in + C_cond) * cmp_b
                    + (3 * C_d + C_res + C_skip + C_in) * 4)
        l_tile = max(128, min(4096, (40 * 1024 * 1024) // max(per_lane, 1)))
        if N == 1 and L_out > 256:
            # keep >= 2 L-tiles so both v7x TensorCores get grid steps.
            l_tile = min(l_tile, _round_up(pl.cdiv(L_out, 2), 128))
    l_tile = max(128, halo_block, min(int(l_tile), _round_up(L_out, 128)))
    l_tile = _round_up(l_tile, halo_block)
    tile_blocks = l_tile // halo_block
    n_tiles = pl.cdiv(L_out, l_tile)

    off_res = halo - padding                 # static, >= 0 because 2*pad <= halo
    x_len = x.shape[2]
    hmax_x = (x_len - 1) // halo_block

    if has_cond:
        off_c = condition.shape[2] - L_out
        if off_c > halo_block:
            # TODO(synk): an element-offset fetch would avoid this slice pass.
            condition = condition[:, :, off_c:]
            off_c = 0
        hmax_c = (condition.shape[2] - 1) // halo_block
    else:
        off_c = 0

    # ---- weights reshaped / fused for NCL-layout matmuls -----------------------
    def _bias(b, n):
        return jnp.zeros((n,), jnp.float32) if b is None else b.astype(jnp.float32)

    w_fg = jnp.transpose(conv_w, (0, 2, 1)).reshape(two_cd, K * C_in)
    w_fg = w_fg.astype(compute_dtype)
    b_fg = _bias(conv_b, two_cd)
    if has_cond:
        w_c = cond_w[:, :, 0].astype(compute_dtype)
        b_fg = b_fg + _bias(cond_b, two_cd)
    w_rs = jnp.concatenate([res_w[:, :, 0], skip_w[:, :, 0]], axis=0)
    w_rs = w_rs.astype(compute_dtype)
    b_rs = jnp.concatenate([_bias(res_b, C_res), _bias(skip_b, C_skip)], axis=0)
    b_fg = b_fg.reshape(two_cd, 1)
    b_rs = b_rs.reshape(C_res + C_skip, 1)

    fuse_fg = (C_d % 8 == 0)        # f32 result split at row Cd stays sublane aligned
    fuse_rs = (C_res % 8 == 0)

    # ---- inputs / BlockSpecs ----------------------------------------------------
    inputs = [x, x]
    in_specs = [
        pl.BlockSpec((1, C_in, l_tile), lambda n, t: (n, 0, t)),
        pl.BlockSpec((1, C_in, halo_block), _halo_index_map(tile_blocks, hmax_x)),
    ]
    if has_cond:
        inputs += [condition, condition]
        in_specs += [
            pl.BlockSpec((1, C_cond, l_tile), lambda n, t: (n, 0, t)),
            pl.BlockSpec((1, C_cond, halo_block),
                         _halo_index_map(tile_blocks, hmax_c)),
        ]
    inputs += [w_fg, b_fg]
    in_specs += [pl.BlockSpec((two_cd, K * C_in), lambda n, t: (0, 0)),
                 pl.BlockSpec((two_cd, 1), lambda n, t: (0, 0))]
    if has_cond:
        inputs += [w_c]
        in_specs += [pl.BlockSpec((two_cd, C_cond), lambda n, t: (0, 0))]
    inputs += [w_rs, b_rs]
    in_specs += [pl.BlockSpec((C_res + C_skip, C_d), lambda n, t: (0, 0)),
                 pl.BlockSpec((C_res + C_skip, 1), lambda n, t: (0, 0))]

    # ---- VMEM limit from the actual double-buffered working set ----------------
    io_bytes = 2 * (C_in * x_b + C_cond * c_b) * (l_tile + halo_block)
    io_bytes += 2 * (C_res + C_skip) * l_tile * o_b
    w_bytes = 2 * (two_cd * (K * C_in + C_cond) * cmp_b + two_cd * 4
                   + (C_res + C_skip) * (C_d * cmp_b + 4))
    tmp_bytes = l_tile * ((K * C_in + C_cond) * cmp_b + two_cd * 4
                          + C_d * (4 + cmp_b) + (C_res + C_skip) * 4 + C_in * 4)
    vmem_limit = int(min(max(2 * (io_bytes + w_bytes + tmp_bytes),
                             32 * 1024 * 1024), 128 * 1024 * 1024))

    kernel = functools.partial(
        _residual_block_kernel, K=K, dilation=dilation, off_res=off_res,
        off_c=off_c, C_d=C_d, C_res=C_res, fuse_fg=fuse_fg, fuse_rs=fuse_rs,
        has_cond=has_cond, compute_dtype=compute_dtype)

    out, skip = pl.pallas_call(
        kernel,
        out_shape=(jax.ShapeDtypeStruct((N, C_res, L_out), out_dtype),
                   jax.ShapeDtypeStruct((N, C_skip, L_out), out_dtype)),
        grid=(N, n_tiles),
        in_specs=in_specs,
        out_specs=(pl.BlockSpec((1, C_res, l_tile), lambda n, t: (n, 0, t)),
                   pl.BlockSpec((1, C_skip, l_tile), lambda n, t: (n, 0, t))),
        compiler_params=pltpu.CompilerParams(
            dimension_semantics=("parallel", "parallel"),
            vmem_limit_bytes=vmem_limit),
    )(*inputs)
    return out, skip


def _reference(x, condition, conv_w, conv_b, cond_w, cond_b,
               res_w, res_b, skip_w, skip_b, *, stride, padding, dilation):
    """Pure-JAX/XLA reference mirroring the PyTorch forward."""
    dn = ("NCH", "OIH", "NCH")
    hi = jax.lax.Precision.HIGHEST
    C_d = conv_w.shape[0] // 2

    y = jax.lax.conv_general_dilated(
        x, conv_w, (stride,), [(padding, padding)], rhs_dilation=(dilation,),
        dimension_numbers=dn, precision=hi) + conv_b[None, :, None]
    f, g = y[:, :C_d], y[:, C_d:]
    if condition is not None:
        L_out = f.shape[2]
        c = condition[:, :, condition.shape[2] - L_out:]
        yc = jax.lax.conv_general_dilated(
            c, cond_w, (stride,), [(padding, padding)], rhs_dilation=(dilation,),
            dimension_numbers=dn, precision=hi) + cond_b[None, :, None]
        f = f + yc[:, :C_d]
        g = g + yc[:, C_d:]
    h = jnp.tanh(f) * jax.nn.sigmoid(g)
    res = jax.lax.conv_general_dilated(
        h, res_w, (1,), [(0, 0)], dimension_numbers=dn,
        precision=hi) + res_b[None, :, None]
    skp = jax.lax.conv_general_dilated(
        h, skip_w, (1,), [(0, 0)], dimension_numbers=dn,
        precision=hi) + skip_b[None, :, None]
    out = x[:, :, x.shape[2] - res.shape[2]:] + res
    return out, skp


if __name__ == "__main__":
    key = jax.random.PRNGKey(0)

    def uinit(k, shape, fan_in):
        b = 1.0 / math.sqrt(fan_in)
        return jax.random.uniform(k, shape, jnp.float32, -b, b)

    # --- Test 1: conditioned block (canonical WaveNet config, padding=0) --------
    # ResidualBlock(in=8, cond=8, dilation_channels=16, residual=8, skip=16,
    #               kernel_size=2, stride=1, padding=0, dilation=2)
    N, L = 2, 48
    IN_CH = RES_CH = 8
    COND_CH = 8
    DIL_CH = 16
    SKIP_CH = 16
    K, STRIDE, PAD, DIL = 2, 1, 0, 2

    ks = jax.random.split(key, 10)
    x = jax.random.normal(ks[0], (N, IN_CH, L), jnp.float32)
    cond = jax.random.normal(ks[1], (N, COND_CH, L), jnp.float32)
    conv_w = uinit(ks[2], (2 * DIL_CH, IN_CH, K), IN_CH * K)
    conv_b = uinit(ks[3], (2 * DIL_CH,), IN_CH * K)
    cond_w = uinit(ks[4], (2 * DIL_CH, COND_CH, 1), COND_CH)
    cond_b = uinit(ks[5], (2 * DIL_CH,), COND_CH)
    res_w = uinit(ks[6], (RES_CH, DIL_CH, 1), DIL_CH)
    res_b = uinit(ks[7], (RES_CH,), DIL_CH)
    skip_w = uinit(ks[8], (SKIP_CH, DIL_CH, 1), DIL_CH)
    skip_b = uinit(ks[9], (SKIP_CH,), DIL_CH)

    out, skip = residual_block_forward(
        x, cond, conv_w, conv_b, cond_w, cond_b, res_w, res_b, skip_w, skip_b,
        stride=STRIDE, padding=PAD, dilation=DIL)
    out, skip = jax.block_until_ready((out, skip))

    ref_out, ref_skip = _reference(
        x, cond, conv_w, conv_b, cond_w, cond_b, res_w, res_b, skip_w, skip_b,
        stride=STRIDE, padding=PAD, dilation=DIL)

    L_OUT = L - DIL * (K - 1)
    assert out.shape == (N, RES_CH, L_OUT)
    assert skip.shape == (N, SKIP_CH, L_OUT)
    assert jnp.allclose(out, ref_out, atol=1e-2, rtol=1e-2), \
        float(jnp.max(jnp.abs(out - ref_out)))
    assert jnp.allclose(skip, ref_skip, atol=1e-2, rtol=1e-2), \
        float(jnp.max(jnp.abs(skip - ref_skip)))

    # --- Test 2: unconditioned, padding > 0 (pad fallback + non-tap residual) ---
    L2, K2, PAD2, DIL2 = 40, 2, 1, 3
    ks2 = jax.random.split(jax.random.PRNGKey(1), 3)
    x2 = jax.random.normal(ks2[0], (N, IN_CH, L2), jnp.float32)
    conv_w2 = uinit(ks2[1], (2 * DIL_CH, IN_CH, K2), IN_CH * K2)
    conv_b2 = uinit(ks2[2], (2 * DIL_CH,), IN_CH * K2)

    out2, skip2 = residual_block_forward(
        x2, None, conv_w2, conv_b2, None, None, res_w, res_b, skip_w, skip_b,
        stride=1, padding=PAD2, dilation=DIL2)
    out2, skip2 = jax.block_until_ready((out2, skip2))
    ref_out2, ref_skip2 = _reference(
        x2, None, conv_w2, conv_b2, None, None, res_w, res_b, skip_w, skip_b,
        stride=1, padding=PAD2, dilation=DIL2)
    assert out2.shape == ref_out2.shape and skip2.shape == ref_skip2.shape
    assert jnp.allclose(out2, ref_out2, atol=1e-2, rtol=1e-2), \
        float(jnp.max(jnp.abs(out2 - ref_out2)))
    assert jnp.allclose(skip2, ref_skip2, atol=1e-2, rtol=1e-2), \
        float(jnp.max(jnp.abs(skip2 - ref_skip2)))

    # --- Test 3: bf16 compute path (recommended on v6e/v7x); loose tolerance ----
    out3, skip3 = residual_block_forward(
        x, cond, conv_w, conv_b, cond_w, cond_b, res_w, res_b, skip_w, skip_b,
        stride=STRIDE, padding=PAD, dilation=DIL, compute_dtype=jnp.bfloat16)
    out3, skip3 = jax.block_until_ready((out3, skip3))
    assert out3.shape == ref_out.shape and skip3.shape == ref_skip.shape
    assert jnp.allclose(out3, ref_out, atol=0.25, rtol=0.1), \
        float(jnp.max(jnp.abs(out3 - ref_out)))
    assert jnp.allclose(skip3, ref_skip, atol=0.25, rtol=0.1), \
        float(jnp.max(jnp.abs(skip3 - ref_skip)))

    print("KERNEL_OK")
</pallas_src>

<mosaic_0001>
module attributes {stable_mosaic.version = 11 : i64} {
  func.func @_residual_block_kernel(%arg0: i32, %arg1: i32, %arg2: memref<1x8x128xf32, #tpu.memory_space<vmem>>, %arg3: memref<1x8x128xf32, #tpu.memory_space<vmem>>, %arg4: memref<1x8x128xf32, #tpu.memory_space<vmem>>, %arg5: memref<1x8x128xf32, #tpu.memory_space<vmem>>, %arg6: memref<32x16xf32, #tpu.memory_space<vmem>>, %arg7: memref<32x1xf32, #tpu.memory_space<vmem>>, %arg8: memref<32x8xf32, #tpu.memory_space<vmem>>, %arg9: memref<24x16xf32, #tpu.memory_space<vmem>>, %arg10: memref<24x1xf32, #tpu.memory_space<vmem>>, %arg11: memref<1x8x128xf32, #tpu.memory_space<vmem>>, %arg12: memref<1x16x128xf32, #tpu.memory_space<vmem>>) attributes {dimension_semantics = [#tpu.dimension_semantics<parallel>, #tpu.dimension_semantics<parallel>], iteration_bounds = array<i64: 2, 1>, scalar_prefetch = 0 : i64, scratch_operands = 0 : i64, tpu.core_type = #tpu.core_type<tc>, window_params = [{transform_indices = @transform_0, window_bounds = array<i64: 1, 8, 128>}, {transform_indices = @transform_1, window_bounds = array<i64: 1, 8, 128>}, {transform_indices = @transform_2, window_bounds = array<i64: 1, 8, 128>}, {transform_indices = @transform_3, window_bounds = array<i64: 1, 8, 128>}, {pipeline_mode = #tpu.pipeline_mode<synchronous>, transform_indices = @transform_4, window_bounds = array<i64: 32, 16>}, {pipeline_mode = #tpu.pipeline_mode<synchronous>, transform_indices = @transform_5, window_bounds = array<i64: 32, 1>}, {pipeline_mode = #tpu.pipeline_mode<synchronous>, transform_indices = @transform_6, window_bounds = array<i64: 32, 8>}, {pipeline_mode = #tpu.pipeline_mode<synchronous>, transform_indices = @transform_7, window_bounds = array<i64: 24, 16>}, {pipeline_mode = #tpu.pipeline_mode<synchronous>, transform_indices = @transform_8, window_bounds = array<i64: 24, 1>}, {transform_indices = @transform_9, window_bounds = array<i64: 1, 8, 128>}, {transform_indices = @transform_10, window_bounds = array<i64: 1, 16, 128>}]} {
    %c0 = arith.constant 0 : index
    %c0_0 = arith.constant 0 : index
    %c0_1 = arith.constant 0 : index
    %0 = vector.load %arg2[%c0, %c0_0, %c0_1] : memref<1x8x128xf32, #tpu.memory_space<vmem>>, vector<1x8x128xf32>
    %1 = vector.shape_cast %0 : vector<1x8x128xf32> to vector<8x128xf32>
    %c0_2 = arith.constant 0 : index
    %c0_3 = arith.constant 0 : index
    %c0_4 = arith.constant 0 : index
    %2 = vector.load %arg3[%c0_2, %c0_3, %c0_4] : memref<1x8x128xf32, #tpu.memory_space<vmem>>, vector<1x8x128xf32>
    %3 = vector.shape_cast %2 : vector<1x8x128xf32> to vector<8x128xf32>
    %4 = vector.extract_strided_slice %1 {offsets = [0, 2], sizes = [8, 126], strides = [1, 1]} : vector<8x128xf32> to vector<8x126xf32>
    %5 = vector.extract_strided_slice %3 {offsets = [0, 0], sizes = [8, 2], strides = [1, 1]} : vector<8x128xf32> to vector<8x2xf32>
    %6 = tpu.concatenate %4, %5 in 1 : vector<8x126xf32>, vector<8x2xf32> -> vector<8x128xf32>
    %7 = tpu.concatenate %1, %6 in 0 : vector<8x128xf32>, vector<8x128xf32> -> vector<16x128xf32>
    %c0_5 = arith.constant 0 : index
    %c0_6 = arith.constant 0 : index
    %c0_7 = arith.constant 0 : index
    %8 = vector.load %arg4[%c0_5, %c0_6, %c0_7] : memref<1x8x128xf32, #tpu.memory_space<vmem>>, vector<1x8x128xf32>
    %9 = vector.shape_cast %8 : vector<1x8x128xf32> to vector<8x128xf32>
    %c0_8 = arith.constant 0 : index
    %c0_9 = arith.constant 0 : index
    %c0_10 = arith.constant 0 : index
    %10 = vector.load %arg5[%c0_8, %c0_9, %c0_10] : memref<1x8x128xf32, #tpu.memory_space<vmem>>, vector<1x8x128xf32>
    %11 = vector.shape_cast %10 : vector<1x8x128xf32> to vector<8x128xf32>
    %12 = vector.extract_strided_slice %9 {offsets = [0, 2], sizes = [8, 126], strides = [1, 1]} : vector<8x128xf32> to vector<8x126xf32>
    %13 = vector.extract_strided_slice %11 {offsets = [0, 0], sizes = [8, 2], strides = [1, 1]} : vector<8x128xf32> to vector<8x2xf32>
    %14 = tpu.concatenate %12, %13 in 1 : vector<8x126xf32>, vector<8x2xf32> -> vector<8x128xf32>
    %c0_11 = arith.constant 0 : index
    %c0_12 = arith.constant 0 : index
    %15 = vector.load %arg6[%c0_11, %c0_12] : memref<32x16xf32, #tpu.memory_space<vmem>>, vector<32x16xf32>
    %cst = arith.constant dense<0.000000e+00> : vector<32x128xf32>
    %16 = tpu.matmul %15, %7, %cst {dimension_numbers = #tpu.dot_dimension_numbers<[1], [0], [0], [1], [0, 0, 1, 1], [], []>} : vector<32x16xf32>, vector<16x128xf32>, vector<32x128xf32> -> vector<32x128xf32>
    %c0_13 = arith.constant 0 : index
    %c0_14 = arith.constant 0 : index
    %17 = vector.load %arg8[%c0_13, %c0_14] : memref<32x8xf32, #tpu.memory_space<vmem>>, vector<32x8xf32>
    %cst_15 = arith.constant dense<0.000000e+00> : vector<32x128xf32>
    %18 = tpu.matmul %17, %14, %cst_15 {dimension_numbers = #tpu.dot_dimension_numbers<[1], [0], [0], [1], [0, 0, 1, 1], [], []>} : vector<32x8xf32>, vector<8x128xf32>, vector<32x128xf32> -> vector<32x128xf32>
    %19 = arith.addf %16, %18 : vector<32x128xf32>
    %c0_16 = arith.constant 0 : index
    %c0_17 = arith.constant 0 : index
    %20 = vector.load %arg7[%c0_16, %c0_17] : memref<32x1xf32, #tpu.memory_space<vmem>>, vector<32x1xf32>
    %21 = vector.broadcast %20 : vector<32x1xf32> to vector<32x128xf32>
    %22 = arith.addf %19, %21 : vector<32x128xf32>
    %23 = vector.extract_strided_slice %22 {offsets = [0, 0], sizes = [16, 128], strides = [1, 1]} : vector<32x128xf32> to vector<16x128xf32>
    %24 = vector.extract_strided_slice %22 {offsets = [16, 0], sizes = [16, 128], strides = [1, 1]} : vector<32x128xf32> to vector<16x128xf32>
    %25 = math.tanh %23 : vector<16x128xf32>
    %cst_18 = arith.constant 5.000000e-01 : f32
    %26 = vector.broadcast %cst_18 : f32 to vector<16x128xf32>
    %27 = arith.mulf %26, %24 : vector<16x128xf32>
    %28 = math.tanh %27 : vector<16x128xf32>
    %cst_19 = arith.constant 5.000000e-01 : f32
    %29 = vector.broadcast %cst_19 : f32 to vector<16x128xf32>
    %30 = arith.mulf %29, %28 : vector<16x128xf32>
    %cst_20 = arith.constant 5.000000e-01 : f32
    %31 = vector.broadcast %cst_20 : f32 to vector<16x128xf32>
    %32 = arith.addf %30, %31 : vector<16x128xf32>
    %33 = arith.mulf %25, %32 : vector<16x128xf32>
    %c0_21 = arith.constant 0 : index
    %c0_22 = arith.constant 0 : index
    %34 = vector.load %arg9[%c0_21, %c0_22] : memref<24x16xf32, #tpu.memory_space<vmem>>, vector<24x16xf32>
    %cst_23 = arith.constant dense<0.000000e+00> : vector<24x128xf32>
    %35 = tpu.matmul %34, %33, %cst_23 {dimension_numbers = #tpu.dot_dimension_numbers<[1], [0], [0], [1], [0, 0, 1, 1], [], []>} : vector<24x16xf32>, vector<16x128xf32>, vector<24x128xf32> -> vector<24x128xf32>
    %c0_24 = arith.constant 0 : index
    %c0_25 = arith.constant 0 : index
    %36 = vector.load %arg10[%c0_24, %c0_25] : memref<24x1xf32, #tpu.memory_space<vmem>>, vector<24x1xf32>
    %37 = vector.broadcast %36 : vector<24x1xf32> to vector<24x128xf32>
    %38 = arith.addf %35, %37 : vector<24x128xf32>
    %39 = vector.extract_strided_slice %38 {offsets = [0, 0], sizes = [8, 128], strides = [1, 1]} : vector<24x128xf32> to vector<8x128xf32>
    %40 = vector.extract_strided_slice %38 {offsets = [8, 0], sizes = [16, 128], strides = [1, 1]} : vector<24x128xf32> to vector<16x128xf32>
    %41 = arith.addf %6, %39 : vector<8x128xf32>
    %c0_26 = arith.constant 0 : index
    %c0_27 = arith.constant 0 : index
    %c0_28 = arith.constant 0 : index
    %42 = vector.load %arg11[%c0_26, %c0_27, %c0_28] : memref<1x8x128xf32, #tpu.memory_space<vmem>>, vector<1x8x128xf32>
    %43 = vector.shape_cast %42 : vector<1x8x128xf32> to vector<8x128xf32>
    %44 = vector.shape_cast %41 : vector<8x128xf32> to vector<1x8x128xf32>
    tpu.vector_store %arg11[%c0_26, %c0_27, %c0_28], %44 {strides = array<i32>} : memref<1x8x128xf32, #tpu.memory_space<vmem>>, vector<1x8x128xf32>,
    %c0_29 = arith.constant 0 : index
    %c0_30 = arith.constant 0 : index
    %c0_31 = arith.constant 0 : index
    %45 = vector.load %arg12[%c0_29, %c0_30, %c0_31] : memref<1x16x128xf32, #tpu.memory_space<vmem>>, vector<1x16x128xf32>
    %46 = vector.shape_cast %45 : vector<1x16x128xf32> to vector<16x128xf32>
    %47 = vector.shape_cast %40 : vector<16x128xf32> to vector<1x16x128xf32>
    tpu.vector_store %arg12[%c0_29, %c0_30, %c0_31], %47 {strides = array<i32>} : memref<1x16x128xf32, #tpu.memory_space<vmem>>, vector<1x16x128xf32>,
    return
  }
  func.func @transform_0(%arg0: i32, %arg1: i32) -> (i32, i32, i32) {
    %c0_i32 = arith.constant 0 : i32
    %c0_i32_0 = arith.constant 0 : i32
    return %arg0, %c0_i32, %arg1 : i32, i32, i32
  }
  func.func @transform_1(%arg0: i32, %arg1: i32) -> (i32, i32, i32) {
    %c1_i32 = arith.constant 1 : i32
    %0 = arith.addi %arg1, %c1_i32 : i32
    %c1_i32_0 = arith.constant 1 : i32
    %1 = arith.muli %0, %c1_i32_0 : i32
    %c0_i32 = arith.constant 0 : i32
    %2 = arith.minsi %1, %c0_i32 : i32
    %c0_i32_1 = arith.constant 0 : i32
    %c0_i32_2 = arith.constant 0 : i32
    return %arg0, %c0_i32_1, %2 : i32, i32, i32
  }
  func.func @transform_2(%arg0: i32, %arg1: i32) -> (i32, i32, i32) {
    %c0_i32 = arith.constant 0 : i32
    %c0_i32_0 = arith.constant 0 : i32
    return %arg0, %c0_i32, %arg1 : i32, i32, i32
  }
  func.func @transform_3(%arg0: i32, %arg1: i32) -> (i32, i32, i32) {
    %c1_i32 = arith.constant 1 : i32
    %0 = arith.addi %arg1, %c1_i32 : i32
    %c1_i32_0 = arith.constant 1 : i32
    %1 = arith.muli %0, %c1_i32_0 : i32
    %c0_i32 = arith.constant 0 : i32
    %2 = arith.minsi %1, %c0_i32 : i32
    %c0_i32_1 = arith.constant 0 : i32
    %c0_i32_2 = arith.constant 0 : i32
    return %arg0, %c0_i32_1, %2 : i32, i32, i32
  }
  func.func @transform_4(%arg0: i32, %arg1: i32) -> (i32, i32) {
    %c0_i32 = arith.constant 0 : i32
    %c0_i32_0 = arith.constant 0 : i32
    %c0_i32_1 = arith.constant 0 : i32
    return %c0_i32, %c0_i32_0 : i32, i32
  }
  func.func @transform_5(%arg0: i32, %arg1: i32) -> (i32, i32) {
    %c0_i32 = arith.constant 0 : i32
    %c0_i32_0 = arith.constant 0 : i32
    %c0_i32_1 = arith.constant 0 : i32
    return %c0_i32, %c0_i32_0 : i32, i32
  }
  func.func @transform_6(%arg0: i32, %arg1: i32) -> (i32, i32) {
    %c0_i32 = arith.constant 0 : i32
    %c0_i32_0 = arith.constant 0 : i32
    %c0_i32_1 = arith.constant 0 : i32
    return %c0_i32, %c0_i32_0 : i32, i32
  }
  func.func @transform_7(%arg0: i32, %arg1: i32) -> (i32, i32) {
    %c0_i32 = arith.constant 0 : i32
    %c0_i32_0 = arith.constant 0 : i32
    %c0_i32_1 = arith.constant 0 : i32
    return %c0_i32, %c0_i32_0 : i32, i32
  }
  func.func @transform_8(%arg0: i32, %arg1: i32) -> (i32, i32) {
    %c0_i32 = arith.constant 0 : i32
    %c0_i32_0 = arith.constant 0 : i32
    %c0_i32_1 = arith.constant 0 : i32
    return %c0_i32, %c0_i32_0 : i32, i32
  }
  func.func @transform_9(%arg0: i32, %arg1: i32) -> (i32, i32, i32) {
    %c0_i32 = arith.constant 0 : i32
    %c0_i32_0 = arith.constant 0 : i32
    return %arg0, %c0_i32, %arg1 : i32, i32, i32
  }
  func.func @transform_10(%arg0: i32, %arg1: i32) -> (i32, i32, i32) {
    %c0_i32 = arith.constant 0 : i32
    %c0_i32_0 = arith.constant 0 : i32
    return %arg0, %c0_i32, %arg1 : i32, i32, i32
  }
}

</mosaic_0001>

<llo_original>
// kernel: tpu_custom_call.1
$region0: #{tpu_custom_call.1}
  #allocation0 [shape = 'u32[]', space=smem, size = 0x4, offset = 0x4, fixed_abs, tag = 'smem constant byte address 0x4 - core index']
  #allocation1 [shape = 'u32[72,128]{1,0:T(1,128)}', space=vmem, size = 0x9000, scoped, tag = 'internal scratch']
  %s0 = inlined_call_operand.vmem [shape: f32[2,8,48], index: 0, kind: input, shape index: {}]
  %s1 = inlined_call_operand.vmem [shape: f32[2,8,48], index: 1, kind: input, shape index: {}]
  %s2 = inlined_call_operand.vmem [shape: f32[2,8,48], index: 2, kind: input, shape index: {}]
  %s3 = inlined_call_operand.vmem [shape: f32[2,8,48], index: 3, kind: input, shape index: {}]
  %s4 = inlined_call_operand.vmem [shape: f32[32,16], index: 4, kind: input, shape index: {}]
  %s5 = inlined_call_operand.vmem [shape: f32[32,1], index: 5, kind: input, shape index: {}]
  %s6 = inlined_call_operand.vmem [shape: f32[32,8], index: 6, kind: input, shape index: {}]
  %s7 = inlined_call_operand.vmem [shape: f32[24,16], index: 7, kind: input, shape index: {}]
  %s8 = inlined_call_operand.vmem [shape: f32[24,1], index: 8, kind: input, shape index: {}]
  %s9 = inlined_call_operand.hbm [shape: f32[2,8,46], index: 9, kind: output, shape index: {0}]
  %s10 = inlined_call_operand.hbm [shape: f32[2,16,46], index: 10, kind: output, shape index: {1}]
  %11 = xla_tuple %s9, %s10
  %s12 = sld [smem:[#allocation0]]
  $region77: #{tpu_custom_call.1} parent=0
    _
  %s14 = ssub.s32 1, %s12
  %s15 = scalar_select 0, %s14, %s12
  $region1: #{tpu_custom_call.1} parent=0
    #allocation2 [shape = 'u8[8192]{0}', space=vmem, size = 0x2000, scoped, tag = 'output window, operand 0']
    #allocation3 [shape = 's32[2]{0}', space=sflag, size = 0x8, scoped, tag = 'scoped memory for tpu_custom_call.1']
    #allocation4 [shape = 'u8[16384]{0}', space=vmem, size = 0x4000, scoped, tag = 'output window, operand 1']
    #allocation5 [shape = 's32[2]{0}', space=sflag, size = 0x8, scoped, tag = 'scoped memory for tpu_custom_call.1']
    %16 = vsyncpa [#allocation3], 0
    %s17 = scalar_lea.sflag [#allocation3], 1
    %18 = vsyncpa %s17, 0
    %19 = vsyncpa [#allocation5], 0
    %s20 = scalar_lea.sflag [#allocation5], 1
    %21 = vsyncpa %s20, 0
    loop: start=0, step=1, limit=4
    $region2: #{tpu_custom_call.1} parent=1 // loop_pre_header
      _
    $region3: #{tpu_custom_call.1} parent=1 // loop_header
      %s23 = sphi 0, %s27
      %p24 = scmp.ge.s32.totalorder %s23, 4
      %s30 = sphi 0, %s42
      %s31 = sphi 0, %s38
      %s32 = sphi 0, %s30
      %s33 = sphi 0, %s31
      %s34 = sphi 0, %s32
      %s35 = sphi 0, %s33
      %s47 = sphi 0, %s49
      %s50 = sphi 0, %s47
      %s51 = sphi 0, %s50
      %s67 = sphi 0, %s51
      %s81 = sphi 0, %s83
      %s84 = sphi 0, %s81
      %s85 = sphi 0, %s84
      %s101 = sphi 0, %s85
      %s109 = sphi 0, %s111
      %s112 = sphi 0, %s109
      %s113 = sphi 0, %s112
      %s129 = sphi 0, %s113
      %s143 = sphi 0, %s145
      %s146 = sphi 0, %s143
      %s147 = sphi 0, %s146
      %s163 = sphi 0, %s147
      %s167 = sphi 0, %s167
      %s169 = sphi 0, %s167
      %s170 = sphi 0, %s169
      %s184 = sphi 0, %s170
      %s188 = sphi 0, %s188
      %s190 = sphi 0, %s188
      %s191 = sphi 0, %s190
      %s205 = sphi 0, %s191
      %s209 = sphi 0, %s209
      %s211 = sphi 0, %s209
      %s212 = sphi 0, %s211
      %s226 = sphi 0, %s212
      %s230 = sphi 0, %s230
      %s232 = sphi 0, %s230
      %s233 = sphi 0, %s232
      %s247 = sphi 0, %s233
      %s251 = sphi 0, %s251
      %s253 = sphi 0, %s251
      %s254 = sphi 0, %s253
      %s268 = sphi 0, %s254
      %s276 = sphi 0, %s278
      %s279 = sphi 0, %s276
      %s280 = sphi 0, %s279
      %s296 = sphi 0, %s280
      %s304 = sphi 0, %s306
      %s307 = sphi 0, %s304
      %s308 = sphi 0, %s307
      %s324 = sphi 0, %s308
    $region4: #{tpu_custom_call.1} parent=1 // loop_header_branch
      %26 = sbr.rel (%p24) target = $region8
    $region5: #{tpu_custom_call.1} parent=1 // loop_body
      %s28 = ssub.s32 %s23, 1
      %s29 = ssub.s32 %s23, 2
      %s36 = sadd.s32 1, %s31
      %p37 = scmp.ge.s32.totalorder %s36, 1
      %s38 = scalar_select %p37, 0, %s36
      %s39 = sadd.s32 1, %s30
      %s40 = scalar_select %p37, %s39, %s30
      %p41 = scmp.ge.s32.totalorder %s40, 2
      %s42 = scalar_select %p41, 0, %s40
      %s43 = ssub.s32 %s30, %s42
      %s44 = ssub.s32 %s31, %s38
      %s45 = sor.u32 %s43, %s44
      %p46 = scmp.eq.s32.totalorder %s45, 0
      %s48 = sadd.s32 %s47, 1
      %s49 = scalar_select %p46, %s47, %s48
      %p52 = pneg %p46
      %p53 = scmp.eq.s32.totalorder %s23, 1
      %p54 = por %p52, %p53
      %p55 = scmp.ne.s32.totalorder %s47, %s50
      %p56 = scmp.eq.s32.totalorder %s23, 0
      %p57 = por %p55, %p56
      %p58 = scmp.ne.s32.totalorder %s47, %s50
      %p59 = scmp.eq.s32.totalorder %s28, 1
      %p60 = por %p58, %p59
      %p61 = scmp.ne.s32.totalorder %s50, %s51
      %p62 = scmp.eq.s32.totalorder %s28, 0
      %p63 = por %p61, %p62
      %p64 = scmp.ne.s32.totalorder %s50, %s51
      %p65 = scmp.eq.s32.totalorder %s29, 1
      %p66 = por %p64, %p65
      %p68 = scmp.ne.s32.totalorder %s51, %s67
      %p69 = scmp.eq.s32.totalorder %s29, 0
      %p70 = por %p68, %p69
      %s71 = sadd.s32 %s31, 1
      %p72 = scmp.lt.s32.totalorder %s71, 0
      %s73 = scalar_select %p72, %s71, 0
      %s74 = sadd.s32 %s38, 1
      %p75 = scmp.lt.s32.totalorder %s74, 0
      %s76 = scalar_select %p75, %s74, 0
      %s77 = ssub.s32 %s30, %s42
      %s78 = ssub.s32 %s73, %s76
      %s79 = sor.u32 %s77, %s78
      %p80 = scmp.eq.s32.totalorder %s79, 0
      %s82 = sadd.s32 %s81, 1
      %s83 = scalar_select %p80, %s81, %s82
      %p86 = pneg %p80
      %p87 = scmp.eq.s32.totalorder %s23, 1
      %p88 = por %p86, %p87
      %p89 = scmp.ne.s32.totalorder %s81, %s84
      %p90 = scmp.eq.s32.totalorder %s23, 0
      %p91 = por %p89, %p90
      %p92 = scmp.ne.s32.totalorder %s81, %s84
      %p93 = scmp.eq.s32.totalorder %s28, 1
      %p94 = por %p92, %p93
      %p95 = scmp.ne.s32.totalorder %s84, %s85
      %p96 = scmp.eq.s32.totalorder %s28, 0
      %p97 = por %p95, %p96
      %p98 = scmp.ne.s32.totalorder %s84, %s85
      %p99 = scmp.eq.s32.totalorder %s29, 1
      %p100 = por %p98, %p99
      %p102 = scmp.ne.s32.totalorder %s85, %s101
      %p103 = scmp.eq.s32.totalorder %s29, 0
      %p104 = por %p102, %p103
      %s105 = ssub.s32 %s30, %s42
      %s106 = ssub.s32 %s31, %s38
      %s107 = sor.u32 %s105, %s106
      %p108 = scmp.eq.s32.totalorder %s107, 0
      %s110 = sadd.s32 %s109, 1
      %s111 = scalar_select %p108, %s109, %s110
      %p114 = pneg %p108
      %p115 = scmp.eq.s32.totalorder %s23, 1
      %p116 = por %p114, %p115
      %p117 = scmp.ne.s32.totalorder %s109, %s112
      %p118 = scmp.eq.s32.totalorder %s23, 0
      %p119 = por %p117, %p118
      %p120 = scmp.ne.s32.totalorder %s109, %s112
      %p121 = scmp.eq.s32.totalorder %s28, 1
      %p122 = por %p120, %p121
      %p123 = scmp.ne.s32.totalorder %s112, %s113
      %p124 = scmp.eq.s32.totalorder %s28, 0
      %p125 = por %p123, %p124
      %p126 = scmp.ne.s32.totalorder %s112, %s113
      %p127 = scmp.eq.s32.totalorder %s29, 1
      %p128 = por %p126, %p127
      %p130 = scmp.ne.s32.totalorder %s113, %s129
      %p131 = scmp.eq.s32.totalorder %s29, 0
      %p132 = por %p130, %p131
      %s133 = sadd.s32 %s31, 1
      %p134 = scmp.lt.s32.totalorder %s133, 0
      %s135 = scalar_select %p134, %s133, 0
      %s136 = sadd.s32 %s38, 1
      %p137 = scmp.lt.s32.totalorder %s136, 0
      %s138 = scalar_select %p137, %s136, 0
      %s139 = ssub.s32 %s30, %s42
      %s140 = ssub.s32 %s135, %s138
      %s141 = sor.u32 %s139, %s140
      %p142 = scmp.eq.s32.totalorder %s141, 0
      %s144 = sadd.s32 %s143, 1
      %s145 = scalar_select %p142, %s143, %s144
      %p148 = pneg %p142
      %p149 = scmp.eq.s32.totalorder %s23, 1
      %p150 = por %p148, %p149
      %p151 = scmp.ne.s32.totalorder %s143, %s146
      %p152 = scmp.eq.s32.totalorder %s23, 0
      %p153 = por %p151, %p152
      %p154 = scmp.ne.s32.totalorder %s143, %s146
      %p155 = scmp.eq.s32.totalorder %s28, 1
      %p156 = por %p154, %p155
      %p157 = scmp.ne.s32.totalorder %s146, %s147
      %p158 = scmp.eq.s32.totalorder %s28, 0
      %p159 = por %p157, %p158
      %p160 = scmp.ne.s32.totalorder %s146, %s147
      %p161 = scmp.eq.s32.totalorder %s29, 1
      %p162 = por %p160, %p161
      %p164 = scmp.ne.s32.totalorder %s147, %s163
      %p165 = scmp.eq.s32.totalorder %s29, 0
      %p166 = por %p164, %p165
      %s168 = sadd.s32 %s167, 1
      %p171 = scmp.eq.s32.totalorder %s23, 1
      %p172 = scmp.ne.s32.totalorder %s167, %s169
      %p173 = scmp.eq.s32.totalorder %s23, 0
      %p174 = por %p172, %p173
      %p175 = scmp.ne.s32.totalorder %s167, %s169
      %p176 = scmp.eq.s32.totalorder %s28, 1
      %p177 = por %p175, %p176
      %p178 = scmp.ne.s32.totalorder %s169, %s170
      %p179 = scmp.eq.s32.totalorder %s28, 0
      %p180 = por %p178, %p179
      %p181 = scmp.ne.s32.totalorder %s169, %s170
      %p182 = scmp.eq.s32.totalorder %s29, 1
      %p183 = por %p181, %p182
      %p185 = scmp.ne.s32.totalorder %s170, %s184
      %p186 = scmp.eq.s32.totalorder %s29, 0
      %p187 = por %p185, %p186
      %s189 = sadd.s32 %s188, 1
      %p192 = scmp.eq.s32.totalorder %s23, 1
      %p193 = scmp.ne.s32.totalorder %s188, %s190
      %p194 = scmp.eq.s32.totalorder %s23, 0
      %p195 = por %p193, %p194
      %p196 = scmp.ne.s32.totalorder %s188, %s190
      %p197 = scmp.eq.s32.totalorder %s28, 1
      %p198 = por %p196, %p197
      %p199 = scmp.ne.s32.totalorder %s190, %s191
      %p200 = scmp.eq.s32.totalorder %s28, 0
      %p201 = por %p199, %p200
      %p202 = scmp.ne.s32.totalorder %s190, %s191
      %p203 = scmp.eq.s32.totalorder %s29, 1
      %p204 = por %p202, %p203
      %p206 = scmp.ne.s32.totalorder %s191, %s205
      %p207 = scmp.eq.s32.totalorder %s29, 0
      %p208 = por %p206, %p207
      %s210 = sadd.s32 %s209, 1
      %p213 = scmp.eq.s32.totalorder %s23, 1
      %p214 = scmp.ne.s32.totalorder %s209, %s211
      %p215 = scmp.eq.s32.totalorder %s23, 0
      %p216 = por %p214, %p215
      %p217 = scmp.ne.s32.totalorder %s209, %s211
      %p218 = scmp.eq.s32.totalorder %s28, 1
      %p219 = por %p217, %p218
      %p220 = scmp.ne.s32.totalorder %s211, %s212
      %p221 = scmp.eq.s32.totalorder %s28, 0
      %p222 = por %p220, %p221
      %p223 = scmp.ne.s32.totalorder %s211, %s212
      %p224 = scmp.eq.s32.totalorder %s29, 1
      %p225 = por %p223, %p224
      %p227 = scmp.ne.s32.totalorder %s212, %s226
      %p228 = scmp.eq.s32.totalorder %s29, 0
      %p229 = por %p227, %p228
      %s231 = sadd.s32 %s230, 1
      %p234 = scmp.eq.s32.totalorder %s23, 1
      %p235 = scmp.ne.s32.totalorder %s230, %s232
      %p236 = scmp.eq.s32.totalorder %s23, 0
      %p237 = por %p235, %p236
      %p238 = scmp.ne.s32.totalorder %s230, %s232
      %p239 = scmp.eq.s32.totalorder %s28, 1
      %p240 = por %p238, %p239
      %p241 = scmp.ne.s32.totalorder %s232, %s233
      %p242 = scmp.eq.s32.totalorder %s28, 0
      %p243 = por %p241, %p242
      %p244 = scmp.ne.s32.totalorder %s232, %s233
      %p245 = scmp.eq.s32.totalorder %s29, 1
      %p246 = por %p244, %p245
      %p248 = scmp.ne.s32.totalorder %s233, %s247
      %p249 = scmp.eq.s32.totalorder %s29, 0
      %p250 = por %p248, %p249
      %s252 = sadd.s32 %s251, 1
      %p255 = scmp.eq.s32.totalorder %s23, 1
      %p256 = scmp.ne.s32.totalorder %s251, %s253
      %p257 = scmp.eq.s32.totalorder %s23, 0
      %p258 = por %p256, %p257
      %p259 = scmp.ne.s32.totalorder %s251, %s253
      %p260 = scmp.eq.s32.totalorder %s28, 1
      %p261 = por %p259, %p260
      %p262 = scmp.ne.s32.totalorder %s253, %s254
      %p263 = scmp.eq.s32.totalorder %s28, 0
      %p264 = por %p262, %p263
      %p265 = scmp.ne.s32.totalorder %s253, %s254
      %p266 = scmp.eq.s32.totalorder %s29, 1
      %p267 = por %p265, %p266
      %p269 = scmp.ne.s32.totalorder %s254, %s268
      %p270 = scmp.eq.s32.totalorder %s29, 0
      %p271 = por %p269, %p270
      %s272 = ssub.s32 %s30, %s42
      %s273 = ssub.s32 %s31, %s38
      %s274 = sor.u32 %s272, %s273
      %p275 = scmp.eq.s32.totalorder %s274, 0
      %s277 = sadd.s32 %s276, 1
      %s278 = scalar_select %p275, %s276, %s277
      %p281 = pneg %p275
      %p282 = scmp.eq.s32.totalorder %s23, 1
      %p283 = por %p281, %p282
      %p284 = scmp.ne.s32.totalorder %s276, %s279
      %p285 = scmp.eq.s32.totalorder %s23, 0
      %p286 = por %p284, %p285
      %p287 = scmp.ne.s32.totalorder %s276, %s279
      %p288 = scmp.eq.s32.totalorder %s28, 1
      %p289 = por %p287, %p288
      %p290 = scmp.ne.s32.totalorder %s279, %s280
      %p291 = scmp.eq.s32.totalorder %s28, 0
      %p292 = por %p290, %p291
      %p293 = scmp.ne.s32.totalorder %s279, %s280
      %p294 = scmp.eq.s32.totalorder %s29, 1
      %p295 = por %p293, %p294
      %p297 = scmp.ne.s32.totalorder %s280, %s296
      %p298 = scmp.eq.s32.totalorder %s29, 0
      %p299 = por %p297, %p298
      %s300 = ssub.s32 %s30, %s42
      %s301 = ssub.s32 %s31, %s38
      %s302 = sor.u32 %s300, %s301
      %p303 = scmp.eq.s32.totalorder %s302, 0
      %s305 = sadd.s32 %s304, 1
      %s306 = scalar_select %p303, %s304, %s305
      %p309 = pneg %p303
      %p310 = scmp.eq.s32.totalorder %s23, 1
      %p311 = por %p309, %p310
      %p312 = scmp.ne.s32.totalorder %s304, %s307
      %p313 = scmp.eq.s32.totalorder %s23, 0
      %p314 = por %p312, %p313
      %p315 = scmp.ne.s32.totalorder %s304, %s307
      %p316 = scmp.eq.s32.totalorder %s28, 1
      %p317 = por %p315, %p316
      %p318 = scmp.ne.s32.totalorder %s307, %s308
      %p319 = scmp.eq.s32.totalorder %s28, 0
      %p320 = por %p318, %p319
      %p321 = scmp.ne.s32.totalorder %s307, %s308
      %p322 = scmp.eq.s32.totalorder %s29, 1
      %p323 = por %p321, %p322
      %p325 = scmp.ne.s32.totalorder %s308, %s324
      %p326 = scmp.eq.s32.totalorder %s29, 0
      %p327 = por %p325, %p326
      %p328 = scmp.le.s32.totalorder 1, %s23
      %p329 = scmp.lt.s32.totalorder %s23, 3
      %p330 = pnand %p328, %p329
      %p331 = pneg %p330
      // Predicated region
      $region9: #{tpu_custom_call.1} parent=5 // pred_check
        _
      $region10: #{tpu_custom_call.1} parent=5 // pred_check_branch
        %333 = sbr.rel (%p330) target = $region12
      $region11: #{tpu_custom_call.1} parent=5 // pred_region
        %s334 = ssub.s32 %s23, 1
        // Predicated region
        $region13: #{tpu_custom_call.1} parent=11 // pred_check
          %p335 = pneg %p180
        $region14: #{tpu_custom_call.1} parent=11 // pred_check_branch
          %337 = sbr.rel (%p335) target = $region16
        $region15: #{tpu_custom_call.1} parent=11 // pred_region
          _
        $region16: #{tpu_custom_call.1} parent=11 // pred_fallthru
          _
        // Predicated region
        $region17: #{tpu_custom_call.1} parent=11 // pred_check
          %p338 = pneg %p201
        $region18: #{tpu_custom_call.1} parent=11 // pred_check_branch
          %340 = sbr.rel (%p338) target = $region20
        $region19: #{tpu_custom_call.1} parent=11 // pred_region
          _
        $region20: #{tpu_custom_call.1} parent=11 // pred_fallthru
          _
        // Predicated region
        $region21: #{tpu_custom_call.1} parent=11 // pred_check
          %p341 = pneg %p222
        $region22: #{tpu_custom_call.1} parent=11 // pred_check_branch
          %343 = sbr.rel (%p341) target = $region24
        $region23: #{tpu_custom_call.1} parent=11 // pred_region
          _
        $region24: #{tpu_custom_call.1} parent=11 // pred_fallthru
          _
        // Predicated region
        $region25: #{tpu_custom_call.1} parent=11 // pred_check
          %p344 = pneg %p243
        $region26: #{tpu_custom_call.1} parent=11 // pred_check_branch
          %346 = sbr.rel (%p344) target = $region28
        $region27: #{tpu_custom_call.1} parent=11 // pred_region
          _
        $region28: #{tpu_custom_call.1} parent=11 // pred_fallthru
          _
        // Predicated region
        $region29: #{tpu_custom_call.1} parent=11 // pred_check
          %p347 = pneg %p264
        $region30: #{tpu_custom_call.1} parent=11 // pred_check_branch
          %349 = sbr.rel (%p347) target = $region32
        $region31: #{tpu_custom_call.1} parent=11 // pred_region
          _
        $region32: #{tpu_custom_call.1} parent=11 // pred_fallthru
          _
      $region12: #{tpu_custom_call.1} parent=5 // pred_fallthru
        _
      %p350 = scmp.lt.s32.totalorder %s23, 2
      // Predicated region
      $region33: #{tpu_custom_call.1} parent=5 // pred_check
        %p351 = pneg %p350
      $region34: #{tpu_custom_call.1} parent=5 // pred_check_branch
        %353 = sbr.rel (%p351) target = $region36
      $region35: #{tpu_custom_call.1} parent=5 // pred_region
        // Predicated region
        $region37: #{tpu_custom_call.1} parent=35 // pred_check
          %p354 = pneg %p57
        $region38: #{tpu_custom_call.1} parent=35 // pred_check_branch
          %356 = sbr.rel (%p354) target = $region40
        $region39: #{tpu_custom_call.1} parent=35 // pred_region
          %p357 = scmp.lt.s32.totalorder %s30, 1
          %s358 = scalar_select %p357, %s30, 1
          %p359 = scmp.lt.s32.totalorder %s31, 0
          %s360 = scalar_select %p359, %s31, 0
          %s361 = sadd.s32 %s360, %s358
          %s362 = smul.addr %s361, 8
          %s363 = scalar_lea.vmem %s0, %s362
        $region40: #{tpu_custom_call.1} parent=35 // pred_fallthru
          _
        // Predicated region
        $region41: #{tpu_custom_call.1} parent=35 // pred_check
          %p364 = pneg %p91
        $region42: #{tpu_custom_call.1} parent=35 // pred_check_branch
          %366 = sbr.rel (%p364) target = $region44
        $region43: #{tpu_custom_call.1} parent=35 // pred_region
          %s367 = sadd.s32 %s31, 1
          %p368 = scmp.lt.s32.totalorder %s367, 0
          %s369 = scalar_select %p368, %s367, 0
          %p370 = scmp.lt.s32.totalorder %s30, 1
          %s371 = scalar_select %p370, %s30, 1
          %p372 = scmp.lt.s32.totalorder %s369, 0
          %s373 = scalar_select %p372, %s369, 0
          %s374 = sadd.s32 %s373, %s371
          %s375 = smul.addr %s374, 8
          %s376 = scalar_lea.vmem %s1, %s375
          %s377 = sadd.s32 %s31, 1
          %p378 = scmp.lt.s32.totalorder %s377, 0
          %s379 = scalar_select %p378, %s377, 0
        $region44: #{tpu_custom_call.1} parent=35 // pred_fallthru
          _
        // Predicated region
        $region45: #{tpu_custom_call.1} parent=35 // pred_check
          %p380 = pneg %p119
        $region46: #{tpu_custom_call.1} parent=35 // pred_check_branch
          %382 = sbr.rel (%p380) target = $region48
        $region47: #{tpu_custom_call.1} parent=35 // pred_region
          %p383 = scmp.lt.s32.totalorder %s30, 1
          %s384 = scalar_select %p383, %s30, 1
          %p385 = scmp.lt.s32.totalorder %s31, 0
          %s386 = scalar_select %p385, %s31, 0
          %s387 = sadd.s32 %s386, %s384
          %s388 = smul.addr %s387, 8
          %s389 = scalar_lea.vmem %s2, %s388
        $region48: #{tpu_custom_call.1} parent=35 // pred_fallthru
          _
        // Predicated region
        $region49: #{tpu_custom_call.1} parent=35 // pred_check
          %p390 = pneg %p153
        $region50: #{tpu_custom_call.1} parent=35 // pred_check_branch
          %392 = sbr.rel (%p390) target = $region52
        $region51: #{tpu_custom_call.1} parent=35 // pred_region
          %s393 = sadd.s32 %s31, 1
          %p394 = scmp.lt.s32.totalorder %s393, 0
          %s395 = scalar_select %p394, %s393, 0
          %p396 = scmp.lt.s32.totalorder %s30, 1
          %s397 = scalar_select %p396, %s30, 1
          %p398 = scmp.lt.s32.totalorder %s395, 0
          %s399 = scalar_select %p398, %s395, 0
          %s400 = sadd.s32 %s399, %s397
          %s401 = smul.addr %s400, 8
          %s402 = scalar_lea.vmem %s3, %s401
          %s403 = sadd.s32 %s31, 1
          %p404 = scmp.lt.s32.totalorder %s403, 0
          %s405 = scalar_select %p404, %s403, 0
        $region52: #{tpu_custom_call.1} parent=35 // pred_fallthru
          _
      $region36: #{tpu_custom_call.1} parent=5 // pred_fallthru
        _
      %p406 = scmp.le.s32.totalorder 1, %s23
      %p407 = scmp.lt.s32.totalorder %s23, 3
      %p408 = pnand %p406, %p407
      %p409 = pneg %p408
      // Predicated region
      $region53: #{tpu_custom_call.1} parent=5 // pred_check
        _
      $region54: #{tpu_custom_call.1} parent=5 // pred_check_branch
        %411 = sbr.rel (%p408) target = $region56
      $region55: #{tpu_custom_call.1} parent=5 // pred_region
        %s412 = ssub.s32 %s23, 1
        %p413 = scmp.lt.s32.totalorder %s32, 1
        %s414 = scalar_select %p413, %s32, 1
        %p415 = scmp.lt.s32.totalorder %s33, 0
        %s416 = scalar_select %p415, %s33, 0
        %s417 = sadd.s32 %s416, %s414
        %s418 = smul.addr %s417, 8
        %s419 = scalar_lea.vmem %s0, %s418
        %p420 = pneg %p63
        %p421 = pneg %p60
        %s422 = sadd.s32 %s33, 1
        %p423 = scmp.lt.s32.totalorder %s422, 0
        %s424 = scalar_select %p423, %s422, 0
        %p425 = scmp.lt.s32.totalorder %s32, 1
        %s426 = scalar_select %p425, %s32, 1
        %p427 = scmp.lt.s32.totalorder %s424, 0
        %s428 = scalar_select %p427, %s424, 0
        %s429 = sadd.s32 %s428, %s426
        %s430 = smul.addr %s429, 8
        %s431 = scalar_lea.vmem %s1, %s430
        %p432 = pneg %p97
        %p433 = pneg %p94
        %p434 = scmp.lt.s32.totalorder %s32, 1
        %s435 = scalar_select %p434, %s32, 1
        %p436 = scmp.lt.s32.totalorder %s33, 0
        %s437 = scalar_select %p436, %s33, 0
        %s438 = sadd.s32 %s437, %s435
        %s439 = smul.addr %s438, 8
        %s440 = scalar_lea.vmem %s2, %s439
        %p441 = pneg %p125
        %p442 = pneg %p122
        %s443 = sadd.s32 %s33, 1
        %p444 = scmp.lt.s32.totalorder %s443, 0
        %s445 = scalar_select %p444, %s443, 0
        %p446 = scmp.lt.s32.totalorder %s32, 1
        %s447 = scalar_select %p446, %s32, 1
        %p448 = scmp.lt.s32.totalorder %s445, 0
        %s449 = scalar_select %p448, %s445, 0
        %s450 = sadd.s32 %s449, %s447
        %s451 = smul.addr %s450, 8
        %s452 = scalar_lea.vmem %s3, %s451
        %p453 = pneg %p159
        %p454 = pneg %p156
        %p455 = pneg %p180
        %p456 = pneg %p177
        %p457 = pneg %p201
        %p458 = pneg %p198
        %p459 = pneg %p222
        %p460 = pneg %p219
        %p461 = pneg %p243
        %p462 = pneg %p240
        %p463 = pneg %p264
        %p464 = pneg %p261
        %p465 = pneg %p292
        %p466 = pneg %p289
        %s467 = sand.u32 %s279, 1
        %s468 = scalar_lea.sflag [#allocation3], %s467
        %s469 = sand.u32 %s279, 1
        %s470 = smul.addr %s469, 8
        %s471 = scalar_lea.vmem [#allocation2], %s470
        %p472 = pneg %p320
        %p473 = pneg %p317
        %s474 = sand.u32 %s307, 1
        %s475 = scalar_lea.sflag [#allocation5], %s474
        %s476 = sand.u32 %s307, 1
        %s477 = smul.addr %s476, 16
        %s478 = scalar_lea.vmem [#allocation4], %s477
        %p479 = scmp.lt.s32.totalorder %s32, 1
        %s480 = scalar_select %p479, %s32, 1
        %p481 = scmp.lt.s32.totalorder %s33, 0
        %s482 = scalar_select %p481, %s33, 0
        %s483 = sadd.s32 %s482, %s480
        %s484 = smul.addr %s483, 8
        %s485 = scalar_lea.vmem %s0, %s484
        %s486 = sadd.s32 %s33, 1
        %p487 = scmp.lt.s32.totalorder %s486, 0
        %s488 = scalar_select %p487, %s486, 0
        %p489 = scmp.lt.s32.totalorder %s32, 1
        %s490 = scalar_select %p489, %s32, 1
        %p491 = scmp.lt.s32.totalorder %s488, 0
        %s492 = scalar_select %p491, %s488, 0
        %s493 = sadd.s32 %s492, %s490
        %s494 = smul.addr %s493, 8
        %s495 = scalar_lea.vmem %s1, %s494
        %s496 = sadd.s32 %s33, 1
        %p497 = scmp.lt.s32.totalorder %s496, 0
        %s498 = scalar_select %p497, %s496, 0
        %p499 = scmp.lt.s32.totalorder %s32, 1
        %s500 = scalar_select %p499, %s32, 1
        %p501 = scmp.lt.s32.totalorder %s33, 0
        %s502 = scalar_select %p501, %s33, 0
        %s503 = sadd.s32 %s502, %s500
        %s504 = smul.addr %s503, 8
        %s505 = scalar_lea.vmem %s2, %s504
        %s506 = sadd.s32 %s33, 1
        %p507 = scmp.lt.s32.totalorder %s506, 0
        %s508 = scalar_select %p507, %s506, 0
        %p509 = scmp.lt.s32.totalorder %s32, 1
        %s510 = scalar_select %p509, %s32, 1
        %p511 = scmp.lt.s32.totalorder %s508, 0
        %s512 = scalar_select %p511, %s508, 0
        %s513 = sadd.s32 %s512, %s510
        %s514 = smul.addr %s513, 8
        %s515 = scalar_lea.vmem %s3, %s514
        %s516 = sadd.s32 %s33, 1
        %p517 = scmp.lt.s32.totalorder %s516, 0
        %s518 = scalar_select %p517, %s516, 0
        %v519 = vld [vmem:[%s485] sm:$0xff]
        %v520 = vld [vmem:[%s495] sm:$0xff]
        %522 = vrot.lane.b32.xlu0 %v519, 126
        %v523 = vpop.permute.xlu0 %522
        %526 = vrot.lane.b32.xlu0 %v520, 126
        %v527 = vpop.permute.xlu0 %526
        %vm529 = vcmask 1031168
        %v530 = vsel %vm529, %v523, %v527
        %v531 = vld [vmem:[%s505] sm:$0xff]
        %v532 = vld [vmem:[%s515] sm:$0xff]
        %534 = vrot.lane.b32.xlu0 %v531, 126
        %v535 = vpop.permute.xlu0 %534
        %538 = vrot.lane.b32.xlu0 %v532, 126
        %v539 = vpop.permute.xlu0 %538
        %v541 = vsel %vm529, %v535, %v539
        %v542 = vld [vmem:[%s4] sm:$0xff]
        %v543 = vld [vmem:[%s4 + $0x8] sm:$0xff]
        %v544 = vld [vmem:[%s4 + $0x10] sm:$0xff]
        %v545 = vld [vmem:[%s4 + $0x18] sm:$0xff]
        %v546 = vld [vmem:[%s6] sm:$0xff]
        %v547 = vld [vmem:[%s6 + $0x8] sm:$0xff]
        %v548 = vld [vmem:[%s6 + $0x10] sm:$0xff]
        %v549 = vld [vmem:[%s6 + $0x18] sm:$0xff]
        %vm550 = vcmask 64512
        %v552 = vsel %vm550, %v546, 0
        %v555 = vsel %vm550, %v547, 0
        %v558 = vsel %vm550, %v548, 0
        %v561 = vsel %vm550, %v549, 0
        %563 = vmatpush.msra.mxu0 0.0
        %564 = vmatpush.msra.mxu0 0.0
        %565 = vmatpush.msra.mxu0 0.0
        %566 = vmatpush.msra.mxu0 0.0
        %567 = vmatpush.msra.mxu0 0.0
        %568 = vmatpush.msra.mxu0 0.0
        %569 = vmatpush.msra.mxu0 0.0
        %570 = vmatpush.msra.mxu0 0.0
        %571 = vmatpush.msra.mxu0 0.0
        %572 = vmatpush.msra.mxu0 0.0
        %573 = vmatpush.msra.mxu0 0.0
        %574 = vmatpush.msra.mxu0 0.0
        %575 = vmatpush.msra.mxu0 0.0
        %576 = vmatpush.msra.mxu0 0.0
        %577 = vmatpush.msra.mxu0 0.0
        %578 = vmatpush.msra.mxu0 %v541
        %579 = vmatmul.f32.gmra.mxu0 %v552
        %v580 = vpop.f32.mrf.mxu0
        %v581 = vadd.f32 0.0, %v580
        %582 = vmatmul.f32.gmra.mxu0 %v555
        %v583 = vpop.f32.mrf.mxu0
        %v584 = vadd.f32 0.0, %v583
        %585 = vmatmul.f32.gmra.mxu0 %v558
        %v586 = vpop.f32.mrf.mxu0
        %v587 = vadd.f32 0.0, %v586
        %588 = vmatmul.f32.gmra.mxu0 %v561
        %v589 = vpop.f32.mrf.mxu0
        %v590 = vadd.f32 0.0, %v589
        %591 = vdwg.mxu0
        %vm592 = vcmask 130048
        %v594 = vsel %vm592, %v542, 0
        %v597 = vsel %vm592, %v543, 0
        %v600 = vsel %vm592, %v544, 0
        %v603 = vsel %vm592, %v545, 0
        %605 = vmatpush.msra.mxu0 0.0
        %606 = vmatpush.msra.mxu0 0.0
        %607 = vmatpush.msra.mxu0 0.0
        %608 = vmatpush.msra.mxu0 0.0
        %609 = vmatpush.msra.mxu0 0.0
        %610 = vmatpush.msra.mxu0 0.0
        %611 = vmatpush.msra.mxu0 0.0
        %612 = vmatpush.msra.mxu0 0.0
        %613 = vmatpush.msra.mxu0 0.0
        %614 = vmatpush.msra.mxu0 0.0
        %615 = vmatpush.msra.mxu0 0.0
        %616 = vmatpush.msra.mxu0 0.0
        %617 = vmatpush.msra.mxu0 0.0
        %618 = vmatpush.msra.mxu0 0.0
        %619 = vmatpush.msra.mxu0 %v530
        %620 = vmatpush.msra.mxu0 %v519
        %621 = vmatmul.f32.gmra.mxu0 %v594
        %v622 = vpop.f32.mrf.mxu0
        %v623 = vadd.f32 %v581, %v622
        %624 = vmatmul.f32.gmra.mxu0 %v597
        %v625 = vpop.f32.mrf.mxu0
        %v626 = vadd.f32 %v584, %v625
        %627 = vmatmul.f32.gmra.mxu0 %v600
        %v628 = vpop.f32.mrf.mxu0
        %v629 = vadd.f32 %v587, %v628
        %630 = vmatmul.f32.gmra.mxu0 %v603
        %v631 = vpop.f32.mrf.mxu0
        %v632 = vadd.f32 %v590, %v631
        %633 = vdwg.mxu0
        %v634 = vld [vmem:[%s5] sm:$0xff]
        %v635 = vld [vmem:[%s5 + $0x8] sm:$0xff]
        %v636 = vld [vmem:[%s5 + $0x10] sm:$0xff]
        %v637 = vld [vmem:[%s5 + $0x18] sm:$0xff]
        %639 = vset.pattern.permute.xlu0 0
        %640 = vperm.xlu0 %639, %v634
        %v641 = vpop.permute.xlu0 %640
        %644 = vset.pattern.permute.xlu0 0
        %645 = vperm.xlu0 %644, %v635
        %v646 = vpop.permute.xlu0 %645
        %649 = vset.pattern.permute.xlu0 0
        %650 = vperm.xlu0 %649, %v636
        %v651 = vpop.permute.xlu0 %650
        %654 = vset.pattern.permute.xlu0 0
        %655 = vperm.xlu0 %654, %v637
        %v656 = vpop.permute.xlu0 %655
        %v658 = vadd.f32 %v623, %v641
        %v659 = vadd.f32 %v626, %v646
        %v660 = vadd.f32 %v629, %v651
        %v661 = vadd.f32 %v632, %v656
        %v662 = vtanh.pop %v658
        %v663 = vtanh.pop %v659
        %v664 = vmul.f32 %v660, 0.5
        %v665 = vmul.f32 %v661, 0.5
        %v666 = vtanh.pop %v664
        %v667 = vtanh.pop %v665
        %v668 = vmul.f32 %v666, 0.5
        %v669 = vmul.f32 %v667, 0.5
        %v670 = vadd.f32 %v668, 0.5
        %v671 = vadd.f32 %v669, 0.5
        %v672 = vmul.f32 %v662, %v670
        %v673 = vmul.f32 %v663, %v671
        %v674 = vld [vmem:[%s7] sm:$0xff]
        %v675 = vld [vmem:[%s7 + $0x8] sm:$0xff]
        %v676 = vld [vmem:[%s7 + $0x10] sm:$0xff]
        %v677 = vld [vmem:[%s8] sm:$0xff]
        %v678 = vld [vmem:[%s8 + $0x8] sm:$0xff]
        %v679 = vld [vmem:[%s8 + $0x10] sm:$0xff]
        %681 = vset.pattern.permute.xlu0 0
        %682 = vperm.xlu0 %681, %v677
        %v683 = vpop.permute.xlu0 %682
        %686 = vset.pattern.permute.xlu0 0
        %687 = vperm.xlu0 %686, %v678
        %v688 = vpop.permute.xlu0 %687
        %691 = vset.pattern.permute.xlu0 0
        %692 = vperm.xlu0 %691, %v679
        %v693 = vpop.permute.xlu0 %692
        %v696 = vsel %vm592, %v674, 0
        %v699 = vsel %vm592, %v675, 0
        %v702 = vsel %vm592, %v676, 0
        %704 = vmatpush.msra.mxu0 0.0
        %705 = vmatpush.msra.mxu0 0.0
        %706 = vmatpush.msra.mxu0 0.0
        %707 = vmatpush.msra.mxu0 0.0
        %708 = vmatpush.msra.mxu0 0.0
        %709 = vmatpush.msra.mxu0 0.0
        %710 = vmatpush.msra.mxu0 0.0
        %711 = vmatpush.msra.mxu0 0.0
        %712 = vmatpush.msra.mxu0 0.0
        %713 = vmatpush.msra.mxu0 0.0
        %714 = vmatpush.msra.mxu0 0.0
        %715 = vmatpush.msra.mxu0 0.0
        %716 = vmatpush.msra.mxu0 0.0
        %717 = vmatpush.msra.mxu0 0.0
        %718 = vmatpush.msra.mxu0 %v673
        %719 = vmatpush.msra.mxu0 %v672
        %720 = vmatmul.f32.gmra.mxu0 %v696
        %v721 = vpop.f32.mrf.mxu0
        %v722 = vadd.f32 %v683, %v721
        %723 = vmatmul.f32.gmra.mxu0 %v699
        %v724 = vpop.f32.mrf.mxu0
        %v725 = vadd.f32 %v688, %v724
        %726 = vmatmul.f32.gmra.mxu0 %v702
        %v727 = vpop.f32.mrf.mxu0
        %v728 = vadd.f32 %v693, %v727
        %729 = vdwg.mxu0
        %v730 = vadd.f32 %v530, %v722
        %731 = vst [vmem:[%s471] sm:$0xff] %v730
        %732 = vst [vmem:[%s478] sm:$0xff] %v725
        %733 = vst [vmem:[%s478 + $0x8] sm:$0xff] %v728
        %s734 = sand.u32 %s279, 1
        %s735 = scalar_lea.sflag [#allocation3], %s734
        %s736 = sand.u32 %s279, 1
        %s737 = smul.addr %s736, 8
        %s738 = scalar_lea.vmem [#allocation2], %s737
        %s739 = sand.u32 %s307, 1
        %s740 = scalar_lea.sflag [#allocation5], %s739
        %s741 = sand.u32 %s307, 1
        %s742 = smul.addr %s741, 16
        %s743 = scalar_lea.vmem [#allocation4], %s742
        // Predicated region
        $region57: #{tpu_custom_call.1} parent=55 // pred_check
          %p744 = pneg %p289
        $region58: #{tpu_custom_call.1} parent=55 // pred_check_branch
          %746 = sbr.rel (%p744) target = $region60
        $region59: #{tpu_custom_call.1} parent=55 // pred_region
          %748 = vsyncadd %s735, 0
          %s749 = sadd.s32 %s33, %s32
          %s750 = smul.addr %s749, 8
          %s751 = scalar_lea.hbm %s9, %s750
          %s753 = sshll.u32 %s738, 4
          %s754 = int_to_ptr.vmem [resolvable:$true] %s753
          %s755 = sshll.u32 %s751, 4
          %s756 = int_to_ptr.hbm [resolvable:$true] %s755
          %758 = dma.vmem_to_hbm [thread:$0]  %s754, 128, %s756, %s735
        $region60: #{tpu_custom_call.1} parent=55 // pred_fallthru
          _
        // Predicated region
        $region61: #{tpu_custom_call.1} parent=55 // pred_check
          %p759 = pneg %p317
        $region62: #{tpu_custom_call.1} parent=55 // pred_check_branch
          %761 = sbr.rel (%p759) target = $region64
        $region63: #{tpu_custom_call.1} parent=55 // pred_region
          %763 = vsyncadd %s740, 0
          %s764 = smul.addr %s32, 2
          %s765 = sadd.s32 %s33, %s764
          %s766 = smul.addr %s765, 8
          %s767 = scalar_lea.hbm %s10, %s766
          %s768 = sshll.u32 %s743, 4
          %s769 = int_to_ptr.vmem [resolvable:$true] %s768
          %s770 = sshll.u32 %s767, 4
          %s771 = int_to_ptr.hbm [resolvable:$true] %s770
          %776 = dma.vmem_to_hbm [thread:$0]  %s769, 256, %s771, %s740, 128, 128, 8
        $region64: #{tpu_custom_call.1} parent=55 // pred_fallthru
          _
      $region56: #{tpu_custom_call.1} parent=5 // pred_fallthru
        _
      %p777 = scmp.le.s32.totalorder 2, %s23
      // Predicated region
      $region65: #{tpu_custom_call.1} parent=5 // pred_check
        %p778 = pneg %p777
      $region66: #{tpu_custom_call.1} parent=5 // pred_check_branch
        %780 = sbr.rel (%p778) target = $region68
      $region67: #{tpu_custom_call.1} parent=5 // pred_region
        %s781 = ssub.s32 %s23, 2
        // Predicated region
        $region69: #{tpu_custom_call.1} parent=67 // pred_check
          %p782 = pneg %p295
        $region70: #{tpu_custom_call.1} parent=67 // pred_check_branch
          %784 = sbr.rel (%p782) target = $region72
        $region71: #{tpu_custom_call.1} parent=67 // pred_region
          %s785 = sand.u32 %s280, 1
          %s786 = scalar_lea.sflag [#allocation3], %s785
          %s787 = sand.u32 %s280, 1
          %s788 = smul.addr %s787, 8
          %s789 = scalar_lea.vmem [#allocation2], %s788
          %791 = dma.done %s786, 128
        $region72: #{tpu_custom_call.1} parent=67 // pred_fallthru
          _
        // Predicated region
        $region73: #{tpu_custom_call.1} parent=67 // pred_check
          %p792 = pneg %p323
        $region74: #{tpu_custom_call.1} parent=67 // pred_check_branch
          %794 = sbr.rel (%p792) target = $region76
        $region75: #{tpu_custom_call.1} parent=67 // pred_region
          %s795 = sand.u32 %s308, 1
          %s796 = scalar_lea.sflag [#allocation5], %s795
          %s797 = sand.u32 %s308, 1
          %s798 = smul.addr %s797, 16
          %s799 = scalar_lea.vmem [#allocation4], %s798
          %801 = dma.done %s796, 256
        $region76: #{tpu_custom_call.1} parent=67 // pred_fallthru
          _
      $region68: #{tpu_custom_call.1} parent=5 // pred_fallthru
        _
    $region6: #{tpu_custom_call.1} parent=1 // loop_footer
      %s27 = sadd.s32 1, %s23
    $region7: #{tpu_custom_call.1} parent=1 // loop_footer_branch
      %22 = sbr.rel target = $region3
    $region8: #{tpu_custom_call.1} parent=1 // loop_exit
      _
    %802 = vsyncpa [#allocation3], 1
    %s803 = scalar_lea.sflag [#allocation3], 1
    %804 = vsyncpa %s803, 1
    %805 = vsyncpa [#allocation5], 1
    %s806 = scalar_lea.sflag [#allocation5], 1
    %807 = vsyncpa %s806, 1

</llo_original>
